<compile_context>
chip_gen: v6e
topology: v6e:2x2x1
jax: 0.10.0
libtpu: 0.0.40
codegen_flags: <defaults>
</compile_context>

<pallas_src>
import functools
import math

import jax
import jax.numpy as jnp
from jax.experimental import pallas as pl
from jax.experimental.pallas import tpu as pltpu

SMOOTH = 1e-07   # BinaryDiceLoss smooth
EPS = 1e-14      # denominator epsilon in SegmentationLoss
LN2 = math.log(2.0)


def _sublane_mult(*dtypes):
    """Packed-sublane multiple for the strictest (narrowest) input dtype."""
    m = 8
    for dt in dtypes:
        m = max(m, {4: 8, 2: 16, 1: 32}.get(jnp.dtype(dt).itemsize, 8))
    return m


def _round_down(x, m):
    return (x // m) * m


def _vmem_capacity():
    try:
        return int(pltpu.get_tpu_info().vmem_capacity_bytes)
    except Exception:
        return 128 * 1024 * 1024


def _choose_tiles(BN, HW, sm, bytes_per_pair, vmem_cap):
    """Pick (tm, hw_tile) respecting dtype sublane packing + VMEM budget."""
    # --- lane (HW) tile ---
    # Full HW when it fits (no column mask ever); otherwise prefer the largest
    # x128 divisor of HW (still no mask); otherwise a x128 tile + masked tail.
    max_lane = 1024 if sm >= 32 else 2048
    if HW <= max_lane:
        hw_tile = HW
    else:
        hw_tile = 0
        d = _round_down(max_lane, 128)
        while d >= 128:
            if HW % d == 0:
                hw_tile = d
                break
            d -= 128
        if hw_tile == 0:
            hw_tile = _round_down(max_lane, 128)   # ragged tail, corrected in-kernel

    # --- row (sublane) tile ---
    budget = min(16 << 20, vmem_cap // 4)          # all double-buffered input blocks
    rows_fit = max(budget // (2 * hw_tile * bytes_per_pair), sm)
    if BN <= 2 * sm:
        tm = BN                                    # full dim (ok even if not x sm)
    else:
        half = max(_round_down(BN // 2, sm), sm)   # >=2 row blocks (v7x megacore)
        tm = max(_round_down(min(rows_fit, half, 256), sm), sm)
    return tm, hw_tile


def _make_seg_kernel(*, hw_total, hw_tile, acc_w, row_chunk, n_chunks,
                     needs_col_mask, n_pad):
    """Kernel for a given static tiling."""
    inv_hw = 1.0 / float(hw_total)
    n_groups = hw_tile // acc_w

    def chunk_compute(x_raw, y_raw, j):
        # Cast per chunk: inputs stream HBM->VMEM in native (narrow) dtype.
        x = x_raw.astype(jnp.float32)
        y = y_raw.astype(jnp.float32)
        if needs_col_mask:
            col = j * hw_tile + jax.lax.broadcasted_iota(jnp.int32, x.shape, 1)
            valid = col < hw_total
            x = jnp.where(valid, x, 0.0)           # only 2 selects; pad contribution
            y = jnp.where(valid, y, 0.0)           # is removed in the finalize.
        # Shared exp feeds sigmoid + numerically stable BCE (one EUP exp/elem).
        e = jnp.exp(-jnp.abs(x))
        d = 1.0 + e
        r = pl.reciprocal(d, approx=True)          # EUP slot, off the VALU path
        r = r * (2.0 - d * r)                      # one Newton step -> ~f32 exact
        p = jnp.where(x >= 0.0, r, e * r)          # sigmoid(x)
        bce = jnp.maximum(x, 0.0) - x * y + jnp.log1p(e)
        inter_t = p * y
        union_t = p * p + y * y                    # exact even if mask isn't 0/1

        def fold(t):                               # lane-group fold: VALU adds only
            acc = t[:, 0:acc_w]
            for g in range(1, n_groups):
                acc = acc + t[:, g * acc_w:(g + 1) * acc_w]
            return acc

        return fold(inter_t), fold(union_t), fold(bce)

    def kernel(logits_ref, mask_ref, out_ref, inter_acc, union_acc, bce_acc):
        j = pl.program_id(1)                       # HW (reduction) axis, last in grid

        @pl.when(j == 0)
        def _init():
            inter_acc[...] = jnp.zeros_like(inter_acc)
            union_acc[...] = jnp.zeros_like(union_acc)
            bce_acc[...] = jnp.zeros_like(bce_acc)

        if n_chunks == 1:
            i_f, u_f, b_f = chunk_compute(logits_ref[...], mask_ref[...], j)
            inter_acc[...] += i_f
            union_acc[...] += u_f
            bce_acc[...] += b_f
        else:
            # Row-chunked compute keeps f32 temporaries in vregs (no VMEM spill
            # of the full-tile elementwise chain).
            def body(c, carry):
                r0 = pl.multiple_of(c * row_chunk, row_chunk)
                i_f, u_f, b_f = chunk_compute(
                    logits_ref[pl.ds(r0, row_chunk), :],
                    mask_ref[pl.ds(r0, row_chunk), :], j)
                inter_acc[pl.ds(r0, row_chunk), :] += i_f
                union_acc[pl.ds(r0, row_chunk), :] += u_f
                bce_acc[pl.ds(r0, row_chunk), :] += b_f
                return carry
            jax.lax.fori_loop(0, n_chunks, body, 0, unroll=n_chunks <= 8)

        @pl.when(j == pl.num_programs(1) - 1)
        def _fin():
            # Single cross-lane (XLU) reduce per row block.
            inter = jnp.sum(inter_acc[...], axis=1, keepdims=True)
            union = jnp.sum(union_acc[...], axis=1, keepdims=True)
            bce = jnp.sum(bce_acc[...], axis=1, keepdims=True)
            if needs_col_mask and n_pad > 0:
                # Zeroed pad columns contribute sigmoid(0)^2 = 0.25 to union and
                # log1p(exp(0)) = ln 2 to bce per element; subtract deterministically.
                union = union - 0.25 * float(n_pad)
                bce = bce - LN2 * float(n_pad)
            num = 2.0 * inter + SMOOTH
            den = union + SMOOTH
            out_ref[:, 0:1] = 1.0 - num * pl.reciprocal(den, approx=False)
            out_ref[:, 1:2] = bce * inv_hw

    return kernel


def _per_query_losses(logits_2d, mask_2d, tm=None, hw_tile=None):
    """logits_2d, mask_2d: (BN, HW). Returns (dice[BN], ce[BN]) float32."""
    BN, HW = logits_2d.shape
    sm = _sublane_mult(logits_2d.dtype, mask_2d.dtype)
    bytes_per_pair = logits_2d.dtype.itemsize + mask_2d.dtype.itemsize
    vmem_cap = _vmem_capacity()

    auto_tm, auto_hw = _choose_tiles(BN, HW, sm, bytes_per_pair, vmem_cap)
    tm = auto_tm if tm is None else tm
    hw_tile = auto_hw if hw_tile is None else hw_tile

    n_row = pl.cdiv(BN, tm)
    n_hw = pl.cdiv(HW, hw_tile)
    needs_col_mask = (HW % hw_tile) != 0
    n_pad = n_hw * hw_tile - HW
    acc_w = 128 if hw_tile % 128 == 0 else hw_tile
    row_chunk = sm if (tm % sm == 0 and tm > sm) else tm
    n_chunks = tm // row_chunk

    kernel = _make_seg_kernel(
        hw_total=HW, hw_tile=hw_tile, acc_w=acc_w, row_chunk=row_chunk,
        n_chunks=n_chunks, needs_col_mask=needs_col_mask, n_pad=n_pad)

    vmem_limit = int(min(64 << 20, max(32 << 20, (vmem_cap * 3) // 5)))

    out = pl.pallas_call(
        kernel,
        out_shape=jax.ShapeDtypeStruct((BN, 2), jnp.float32),
        grid_spec=pltpu.PrefetchScalarGridSpec(
            num_scalar_prefetch=0,
            grid=(n_row, n_hw),
            in_specs=[
                pl.BlockSpec((tm, hw_tile), lambda i, j: (i, j)),
                pl.BlockSpec((tm, hw_tile), lambda i, j: (i, j)),
            ],
            out_specs=pl.BlockSpec((tm, 2), lambda i, j: (i, 0)),
            scratch_shapes=[
                pltpu.VMEM((tm, acc_w), jnp.float32),  # intersection accumulator
                pltpu.VMEM((tm, acc_w), jnp.float32),  # union accumulator
                pltpu.VMEM((tm, acc_w), jnp.float32),  # bce accumulator
            ],
        ),
        compiler_params=pltpu.CompilerParams(
            dimension_semantics=("parallel", "arbitrary"),
            vmem_limit_bytes=vmem_limit,
        ),
    )(logits_2d, mask_2d)
    return out[:, 0], out[:, 1]


@functools.partial(jax.jit, static_argnames=("tm", "hw_tile"))
def segmentation_loss(logits, mask, query_mask=None, *, tm=None, hw_tile=None):
    """
    logits : (B, N, H, W) unsigmoided predictions (any float dtype)
    mask   : (B, N, H, W) binary targets
    query_mask : (B, N) binary, optional (defaults to all ones)

    Returns (combined_loss, unreduced_batch_dice_loss[B], unreduced_batch_ce_loss[B])
    """
    B, N, H, W = logits.shape
    if query_mask is None:
        query_mask = jnp.ones((B, N), dtype=jnp.float32)
    query_mask = query_mask.astype(jnp.float32)

    # No dtype cast / pad here: the kernel casts per chunk in VMEM (keeps the
    # HBM-traffic savings for bf16/int8 inputs real).  Reshape is metadata-only.
    logits_2d = logits.reshape(B * N, H * W)
    mask_2d = mask.reshape(B * N, H * W)

    dice_bn, ce_bn = _per_query_losses(logits_2d, mask_2d, tm=tm, hw_tile=hw_tile)
    dice_bn = dice_bn.reshape(B, N) * query_mask
    ce_bn = ce_bn.reshape(B, N) * query_mask

    qm_sum = jnp.sum(query_mask) + EPS
    qm_sum_per_b = jnp.sum(query_mask, axis=1) + EPS

    reduced_dice = jnp.sum(dice_bn) / qm_sum
    reduced_ce = jnp.sum(ce_bn) / qm_sum
    unreduced_dice = jnp.sum(dice_bn, axis=1) / qm_sum_per_b
    unreduced_ce = jnp.sum(ce_bn, axis=1) / qm_sum_per_b

    combined = jnp.mean(reduced_ce + reduced_dice)
    return combined, unreduced_dice, unreduced_ce


def _reference(logits, mask, query_mask):
    """Pure-JAX reference mirroring the PyTorch module."""
    B, N, H, W = logits.shape
    logits = logits.astype(jnp.float32)
    mask = mask.astype(jnp.float32)
    p = jax.nn.sigmoid(logits).reshape(B * N, H * W)
    t = mask.reshape(B * N, H * W)
    inter = 2 * jnp.sum(p * t, axis=1) + SMOOTH
    union = jnp.sum(p ** 2 + t ** 2, axis=1) + SMOOTH
    dice = (1 - inter / union).reshape(B, N) * query_mask
    bce = (jnp.maximum(logits, 0) - logits * mask
           + jnp.log1p(jnp.exp(-jnp.abs(logits))))
    ce = jnp.mean(bce, axis=(2, 3)) * query_mask
    qs = jnp.sum(query_mask) + EPS
    qsb = jnp.sum(query_mask, axis=1) + EPS
    return (jnp.sum(ce) / qs + jnp.sum(dice) / qs,
            jnp.sum(dice, axis=1) / qsb,
            jnp.sum(ce, axis=1) / qsb)


def _check(logits, mask, query_mask, **tiles):
    got = segmentation_loss(logits, mask, query_mask, **tiles)
    jax.block_until_ready(got)
    ref = _reference(logits, mask, query_mask)
    for g, r in zip(got, ref):
        assert jnp.allclose(g, r, atol=1e-5, rtol=1e-5), (g, r)


if __name__ == "__main__":
    key = jax.random.PRNGKey(0)

    # Case A: canonical small shape, auto tiling (single block, single chunk).
    k1, k2, k3 = jax.random.split(key, 3)
    B, N, H, W = 2, 4, 16, 16
    logits = jax.random.normal(k1, (B, N, H, W), dtype=jnp.float32) * 2.0
    mask = (jax.random.uniform(k2, (B, N, H, W)) > 0.5).astype(jnp.float32)
    query_mask = (jax.random.uniform(k3, (B, N)) > 0.25).astype(jnp.float32)
    _check(logits, mask, query_mask)

    # Case B: forced HW tiling -> multi-step lane-dense scratch accumulation.
    _check(logits, mask, query_mask, tm=8, hw_tile=128)

    # Case C: ragged rows (BN=15) and ragged HW (HW=320).  Auto path -> full-HW
    # block (no mask); forced hw_tile=128 -> col mask + deterministic pad
    # correction in the finalize.  No jnp.pad anywhere.
    k4, k5, k6 = jax.random.split(jax.random.PRNGKey(1), 3)
    B2, N2, H2, W2 = 3, 5, 16, 20
    logits2 = jax.random.normal(k4, (B2, N2, H2, W2), dtype=jnp.float32) * 2.0
    mask2 = (jax.random.uniform(k5, (B2, N2, H2, W2)) > 0.5).astype(jnp.float32)
    qm2 = (jax.random.uniform(k6, (B2, N2)) > 0.25).astype(jnp.float32)
    _check(logits2, mask2, qm2)
    _check(logits2, mask2, qm2, hw_tile=128)

    # Case D: multiple row blocks (n_row=2, megacore-shardable), multi HW steps,
    # and the in-kernel row-chunk fori_loop.
    k7, k8, k9 = jax.random.split(jax.random.PRNGKey(2), 3)
    B3, N3, H3, W3 = 4, 8, 16, 32
    logits3 = jax.random.normal(k7, (B3, N3, H3, W3), dtype=jnp.float32) * 2.0
    mask3 = (jax.random.uniform(k8, (B3, N3, H3, W3)) > 0.5).astype(jnp.float32)
    qm3 = (jax.random.uniform(k9, (B3, N3)) > 0.25).astype(jnp.float32)
    _check(logits3, mask3, qm3, hw_tile=128)

    # Case E: bf16 logits stream natively (in-kernel cast, dtype-aware sublane tm).
    _check(logits3.astype(jnp.bfloat16), mask3, qm3)

    print("KERNEL_OK")
</pallas_src>

<mosaic_0001>
module attributes {stable_mosaic.version = 11 : i64} {
  func.func @kernel(%arg0: i32, %arg1: i32, %arg2: memref<8x256xf32, #tpu.memory_space<vmem>>, %arg3: memref<8x256xf32, #tpu.memory_space<vmem>>, %arg4: memref<8x2xf32, #tpu.memory_space<vmem>>, %arg5: memref<8x128xf32, #tpu.memory_space<vmem>>, %arg6: memref<8x128xf32, #tpu.memory_space<vmem>>, %arg7: memref<8x128xf32, #tpu.memory_space<vmem>>) attributes {dimension_semantics = [#tpu.dimension_semantics<parallel>, #tpu.dimension_semantics<arbitrary>], iteration_bounds = array<i64: 1, 1>, scalar_prefetch = 0 : i64, scratch_operands = 3 : i64, tpu.core_type = #tpu.core_type<tc>, window_params = [{transform_indices = @transform_0, window_bounds = array<i64: 8, 256>}, {transform_indices = @transform_1, window_bounds = array<i64: 8, 256>}, {transform_indices = @transform_2, window_bounds = array<i64: 8, 2>}]} {
    %c0_i32 = arith.constant 0 : i32
    %0 = arith.cmpi eq, %arg1, %c0_i32 : i32
    %1 = arith.extui %0 : i1 to i32
    %c0_i32_0 = arith.constant 0 : i32
    %2 = arith.cmpi ne, %1, %c0_i32_0 : i32
    scf.if %2 {
      %cst_22 = arith.constant 0.000000e+00 : f32
      %51 = vector.broadcast %cst_22 : f32 to vector<8x128xf32>
      %c0_23 = arith.constant 0 : index
      %c0_24 = arith.constant 0 : index
      %52 = vector.load %arg5[%c0_23, %c0_24] : memref<8x128xf32, #tpu.memory_space<vmem>>, vector<8x128xf32>
      tpu.vector_store %arg5[%c0_23, %c0_24], %51 {strides = array<i32>} : memref<8x128xf32, #tpu.memory_space<vmem>>, vector<8x128xf32>,
      %cst_25 = arith.constant 0.000000e+00 : f32
      %53 = vector.broadcast %cst_25 : f32 to vector<8x128xf32>
      %c0_26 = arith.constant 0 : index
      %c0_27 = arith.constant 0 : index
      %54 = vector.load %arg6[%c0_26, %c0_27] : memref<8x128xf32, #tpu.memory_space<vmem>>, vector<8x128xf32>
      tpu.vector_store %arg6[%c0_26, %c0_27], %53 {strides = array<i32>} : memref<8x128xf32, #tpu.memory_space<vmem>>, vector<8x128xf32>,
      %cst_28 = arith.constant 0.000000e+00 : f32
      %55 = vector.broadcast %cst_28 : f32 to vector<8x128xf32>
      %c0_29 = arith.constant 0 : index
      %c0_30 = arith.constant 0 : index
      %56 = vector.load %arg7[%c0_29, %c0_30] : memref<8x128xf32, #tpu.memory_space<vmem>>, vector<8x128xf32>
      tpu.vector_store %arg7[%c0_29, %c0_30], %55 {strides = array<i32>} : memref<8x128xf32, #tpu.memory_space<vmem>>, vector<8x128xf32>,
    } else {
    }
    %c0 = arith.constant 0 : index
    %c0_1 = arith.constant 0 : index
    %3 = vector.load %arg2[%c0, %c0_1] : memref<8x256xf32, #tpu.memory_space<vmem>>, vector<8x256xf32>
    %c0_2 = arith.constant 0 : index
    %c0_3 = arith.constant 0 : index
    %4 = vector.load %arg3[%c0_2, %c0_3] : memref<8x256xf32, #tpu.memory_space<vmem>>, vector<8x256xf32>
    %5 = math.absf %3 : vector<8x256xf32>
    %cst = arith.constant 0.000000e+00 : f32
    %6 = vector.broadcast %cst : f32 to vector<8x256xf32>
    %7 = arith.subf %6, %5 : vector<8x256xf32>
    %8 = math.exp %7 : vector<8x256xf32>
    %cst_4 = arith.constant 1.000000e+00 : f32
    %9 = vector.broadcast %cst_4 : f32 to vector<8x256xf32>
    %10 = arith.addf %9, %8 : vector<8x256xf32>
    %11 = tpu.reciprocal %10 {approx = true} : vector<8x256xf32> -> vector<8x256xf32>
    %12 = arith.mulf %10, %11 : vector<8x256xf32>
    %cst_5 = arith.constant 2.000000e+00 : f32
    %13 = vector.broadcast %cst_5 : f32 to vector<8x256xf32>
    %14 = arith.subf %13, %12 : vector<8x256xf32>
    %15 = arith.mulf %11, %14 : vector<8x256xf32>
    %cst_6 = arith.constant 0.000000e+00 : f32
    %16 = vector.broadcast %cst_6 : f32 to vector<8x256xf32>
    %17 = arith.cmpf oge, %3, %16 : vector<8x256xf32>
    %18 = arith.mulf %8, %15 : vector<8x256xf32>
    %19 = arith.select %17, %15, %18 : vector<8x256xi1>, vector<8x256xf32>
    %cst_7 = arith.constant 0.000000e+00 : f32
    %20 = vector.broadcast %cst_7 : f32 to vector<8x256xf32>
    %21 = arith.maximumf %3, %20 : vector<8x256xf32>
    %22 = arith.mulf %3, %4 : vector<8x256xf32>
    %23 = arith.subf %21, %22 : vector<8x256xf32>
    %24 = math.log1p %8 : vector<8x256xf32>
    %25 = arith.addf %23, %24 : vector<8x256xf32>
    %26 = arith.mulf %19, %4 : vector<8x256xf32>
    %27 = arith.mulf %19, %19 : vector<8x256xf32>
    %28 = arith.mulf %4, %4 : vector<8x256xf32>
    %29 = arith.addf %27, %28 : vector<8x256xf32>
    %30 = vector.extract_strided_slice %26 {offsets = [0, 0], sizes = [8, 128], strides = [1, 1]} : vector<8x256xf32> to vector<8x128xf32>
    %31 = vector.extract_strided_slice %26 {offsets = [0, 128], sizes = [8, 128], strides = [1, 1]} : vector<8x256xf32> to vector<8x128xf32>
    %32 = arith.addf %30, %31 : vector<8x128xf32>
    %33 = vector.extract_strided_slice %29 {offsets = [0, 0], sizes = [8, 128], strides = [1, 1]} : vector<8x256xf32> to vector<8x128xf32>
    %34 = vector.extract_strided_slice %29 {offsets = [0, 128], sizes = [8, 128], strides = [1, 1]} : vector<8x256xf32> to vector<8x128xf32>
    %35 = arith.addf %33, %34 : vector<8x128xf32>
    %36 = vector.extract_strided_slice %25 {offsets = [0, 0], sizes = [8, 128], strides = [1, 1]} : vector<8x256xf32> to vector<8x128xf32>
    %37 = vector.extract_strided_slice %25 {offsets = [0, 128], sizes = [8, 128], strides = [1, 1]} : vector<8x256xf32> to vector<8x128xf32>
    %38 = arith.addf %36, %37 : vector<8x128xf32>
    %c0_8 = arith.constant 0 : index
    %c0_9 = arith.constant 0 : index
    %39 = vector.load %arg5[%c0_8, %c0_9] : memref<8x128xf32, #tpu.memory_space<vmem>>, vector<8x128xf32>
    %40 = arith.addf %39, %32 : vector<8x128xf32>
    %c0_10 = arith.constant 0 : index
    %c0_11 = arith.constant 0 : index
    %41 = vector.load %arg5[%c0_10, %c0_11] : memref<8x128xf32, #tpu.memory_space<vmem>>, vector<8x128xf32>
    tpu.vector_store %arg5[%c0_10, %c0_11], %40 {strides = array<i32>} : memref<8x128xf32, #tpu.memory_space<vmem>>, vector<8x128xf32>,
    %c0_12 = arith.constant 0 : index
    %c0_13 = arith.constant 0 : index
    %42 = vector.load %arg6[%c0_12, %c0_13] : memref<8x128xf32, #tpu.memory_space<vmem>>, vector<8x128xf32>
    %43 = arith.addf %42, %35 : vector<8x128xf32>
    %c0_14 = arith.constant 0 : index
    %c0_15 = arith.constant 0 : index
    %44 = vector.load %arg6[%c0_14, %c0_15] : memref<8x128xf32, #tpu.memory_space<vmem>>, vector<8x128xf32>
    tpu.vector_store %arg6[%c0_14, %c0_15], %43 {strides = array<i32>} : memref<8x128xf32, #tpu.memory_space<vmem>>, vector<8x128xf32>,
    %c0_16 = arith.constant 0 : index
    %c0_17 = arith.constant 0 : index
    %45 = vector.load %arg7[%c0_16, %c0_17] : memref<8x128xf32, #tpu.memory_space<vmem>>, vector<8x128xf32>
    %46 = arith.addf %45, %38 : vector<8x128xf32>
    %c0_18 = arith.constant 0 : index
    %c0_19 = arith.constant 0 : index
    %47 = vector.load %arg7[%c0_18, %c0_19] : memref<8x128xf32, #tpu.memory_space<vmem>>, vector<8x128xf32>
    tpu.vector_store %arg7[%c0_18, %c0_19], %46 {strides = array<i32>} : memref<8x128xf32, #tpu.memory_space<vmem>>, vector<8x128xf32>,
    %c0_i32_20 = arith.constant 0 : i32
    %48 = arith.cmpi eq, %arg1, %c0_i32_20 : i32
    %49 = arith.extui %48 : i1 to i32
    %c0_i32_21 = arith.constant 0 : i32
    %50 = arith.cmpi ne, %49, %c0_i32_21 : i32
    scf.if %50 {
      %c0_22 = arith.constant 0 : index
      %c0_23 = arith.constant 0 : index
      %51 = vector.load %arg5[%c0_22, %c0_23] : memref<8x128xf32, #tpu.memory_space<vmem>>, vector<8x128xf32>
      %cst_24 = arith.constant dense<0.000000e+00> : vector<8xf32>
      %52 = vector.multi_reduction <add>, %51, %cst_24 [1] : vector<8x128xf32> to vector<8xf32>
      %53 = vector.shape_cast %52 : vector<8xf32> to vector<8x1xf32>
      %c0_25 = arith.constant 0 : index
      %c0_26 = arith.constant 0 : index
      %54 = vector.load %arg6[%c0_25, %c0_26] : memref<8x128xf32, #tpu.memory_space<vmem>>, vector<8x128xf32>
      %cst_27 = arith.constant dense<0.000000e+00> : vector<8xf32>
      %55 = vector.multi_reduction <add>, %54, %cst_27 [1] : vector<8x128xf32> to vector<8xf32>
      %56 = vector.shape_cast %55 : vector<8xf32> to vector<8x1xf32>
      %c0_28 = arith.constant 0 : index
      %c0_29 = arith.constant 0 : index
      %57 = vector.load %arg7[%c0_28, %c0_29] : memref<8x128xf32, #tpu.memory_space<vmem>>, vector<8x128xf32>
      %cst_30 = arith.constant dense<0.000000e+00> : vector<8xf32>
      %58 = vector.multi_reduction <add>, %57, %cst_30 [1] : vector<8x128xf32> to vector<8xf32>
      %59 = vector.shape_cast %58 : vector<8xf32> to vector<8x1xf32>
      %cst_31 = arith.constant 2.000000e+00 : f32
      %60 = vector.broadcast %cst_31 : f32 to vector<8x1xf32>
      %61 = arith.mulf %60, %53 : vector<8x1xf32>
      %cst_32 = arith.constant 1.000000e-07 : f32
      %62 = vector.broadcast %cst_32 : f32 to vector<8x1xf32>
      %63 = arith.addf %61, %62 : vector<8x1xf32>
      %cst_33 = arith.constant 1.000000e-07 : f32
      %64 = vector.broadcast %cst_33 : f32 to vector<8x1xf32>
      %65 = arith.addf %56, %64 : vector<8x1xf32>
      %66 = tpu.reciprocal %65 : vector<8x1xf32> -> vector<8x1xf32>
      %67 = arith.mulf %63, %66 : vector<8x1xf32>
      %cst_34 = arith.constant 1.000000e+00 : f32
      %68 = vector.broadcast %cst_34 : f32 to vector<8x1xf32>
      %69 = arith.subf %68, %67 : vector<8x1xf32>
      %c0_35 = arith.constant 0 : index
      %c0_36 = arith.constant 0 : index
      %70 = vector.load %arg4[%c0_35, %c0_36] : memref<8x2xf32, #tpu.memory_space<vmem>>, vector<8x1xf32>
      tpu.vector_store %arg4[%c0_35, %c0_36], %69 {strides = array<i32>} : memref<8x2xf32, #tpu.memory_space<vmem>>, vector<8x1xf32>,
      %cst_37 = arith.constant 3.906250e-03 : f32
      %71 = vector.broadcast %cst_37 : f32 to vector<8x1xf32>
      %72 = arith.mulf %59, %71 : vector<8x1xf32>
      %c0_38 = arith.constant 0 : index
      %c1 = arith.constant 1 : index
      %73 = vector.load %arg4[%c0_38, %c1] : memref<8x2xf32, #tpu.memory_space<vmem>>, vector<8x1xf32>
      tpu.vector_store %arg4[%c0_38, %c1], %72 {strides = array<i32>} : memref<8x2xf32, #tpu.memory_space<vmem>>, vector<8x1xf32>,
    } else {
    }
    return
  }
  func.func @transform_0(%arg0: i32, %arg1: i32) -> (i32, i32) {
    %c0_i32 = arith.constant 0 : i32
    return %arg0, %arg1 : i32, i32
  }
  func.func @transform_1(%arg0: i32, %arg1: i32) -> (i32, i32) {
    %c0_i32 = arith.constant 0 : i32
    return %arg0, %arg1 : i32, i32
  }
  func.func @transform_2(%arg0: i32, %arg1: i32) -> (i32, i32) {
    %c0_i32 = arith.constant 0 : i32
    %c0_i32_0 = arith.constant 0 : i32
    return %arg0, %c0_i32 : i32, i32
  }
}

</mosaic_0001>

<llo_original>
// kernel: squeeze.2
$region0: #{squeeze.2}
  %s0 = inlined_call_operand.vmem [shape: f32[8], index: 0, kind: input, shape index: {}]
  %s1 = inlined_call_operand.vmem [shape: f32[2,4], index: 1, kind: output, shape index: {}]
  $region1: #{squeeze.2} parent=0
    #allocation0 [shape = 'u8[4096]{0}', space=vmem, size = 0x1000, scoped, tag = 'scoped mem for output reshape']
    #allocation1 [shape = 'u8[4096]{0}', space=vmem, size = 0x1000, scoped, tag = 'scoped mem for input reshape']
    %s3 = sshll.u32 1, 1
    %s4 = ssub.s32 %s3, 1
    %v5 = vld [vmem:[%s0] sm:%s4]
    %6 = vst [vmem:[#allocation1] sm:%s4] %v5
    %v7 = vld [vmem:[#allocation1] sm:$0x1]
    %vm8 = vcmask 31744
    %9 = vst.msk [vmem:[#allocation0] sm:$0x1] %vm8, %v7
    %v10 = vld [vmem:[#allocation1] sm:$0x1]
    %11 = vrot.lane.b32.xlu0 %v10, 124
    %v12 = vpop.permute.xlu0 %11
    %vm13 = vcmask 31744
    %s14 = scalar_lea.vmem [#allocation0], 1
    %15 = vst.msk [vmem:[%s14] sm:$0x1] %vm13, %v12
    %s17 = sshll.u32 1, 2
    %s18 = ssub.s32 %s17, 1
    %v20 = vld [vmem:[#allocation0] sm:%s18]
    %s21 = sshll.u32 1, 2
    %s22 = ssub.s32 %s21, 1
    %23 = vst [vmem:[%s1] sm:%s22] %v20

// kernel: segmentation_loss.1
$region0: #{segmentation_loss.1}
  #allocation0 [shape = 'u32[]', space=smem, size = 0x4, offset = 0x4, fixed_abs, tag = 'smem constant byte address 0x4 - core index']
  #allocation1 [shape = 'u32[144,128]{1,0:T(1,128)}', space=vmem, size = 0x12000, scoped, tag = 'internal scratch']
  #allocation2 [shape = 'f32[8,128]{1,0:T(8,128)}', space=vmem, size = 0x1000, scoped, tag = 'scratch operand']
  #allocation3 [shape = 'f32[8,128]{1,0:T(8,128)}', space=vmem, size = 0x1000, scoped, tag = 'scratch operand']
  #allocation4 [shape = 'f32[8,128]{1,0:T(8,128)}', space=vmem, size = 0x1000, scoped, tag = 'scratch operand']
  %s0 = inlined_call_operand.vmem [shape: f32[8,256], index: 0, kind: input, shape index: {}]
  %s1 = inlined_call_operand.vmem [shape: f32[8,256], index: 1, kind: input, shape index: {}]
  %s2 = inlined_call_operand.vmem [shape: f32[8,2], index: 2, kind: output, shape index: {}]
  %s3 = sld [smem:[#allocation0]]
  $region26: #{segmentation_loss.1} parent=0
    _
  %s5 = ssub.s32 1, %s3
  %s6 = scalar_select 0, %s5, %s3
  // Predicated region
  $region2: #{segmentation_loss.1} parent=0 // pred_check
    _
  $region3: #{segmentation_loss.1} parent=0 // pred_check_branch
    %8 = sbr.rel (0) target = $region5
  $region4: #{segmentation_loss.1} parent=0 // pred_region
    _
  $region5: #{segmentation_loss.1} parent=0 // pred_fallthru
    _
  // Predicated region
  $region6: #{segmentation_loss.1} parent=0 // pred_check
    _
  $region7: #{segmentation_loss.1} parent=0 // pred_check_branch
    %10 = sbr.rel (0) target = $region9
  $region8: #{segmentation_loss.1} parent=0 // pred_region
    _
  $region9: #{segmentation_loss.1} parent=0 // pred_fallthru
    _
  %p11 = scmp.eq.s32.totalorder 0, 0
  // Predicated region
  $region10: #{segmentation_loss.1} parent=0 // pred_check
    %p12 = pneg %p11
  $region11: #{segmentation_loss.1} parent=0 // pred_check_branch
    %14 = sbr.rel (%p12) target = $region13
  $region12: #{segmentation_loss.1} parent=0 // pred_region
    %15 = vst [vmem:[#allocation2] sm:$0xff] 0.0
    %16 = vst [vmem:[#allocation3] sm:$0xff] 0.0
    %17 = vst [vmem:[#allocation4] sm:$0xff] 0.0
  $region13: #{segmentation_loss.1} parent=0 // pred_fallthru
    _
  %v18 = vld [vmem:[%s0] sm:$0xff]
  %v19 = vld [vmem:[%s0 + $0x8] sm:$0xff]
  %v20 = vld [vmem:[%s1] sm:$0xff]
  %v21 = vld [vmem:[%s1 + $0x8] sm:$0xff]
  %v22 = vand.u32 2147483647, %v18
  %v23 = vand.u32 2147483647, %v19
  %v24 = vsub.f32 0.0, %v22
  %v25 = vsub.f32 0.0, %v23
  %v26 = vmul.f32 %v24, 1.442695
  %v27 = vpow.pop %v26
  %v28 = vmul.f32 %v25, 1.442695
  %v29 = vpow.pop %v28
  %v30 = vadd.f32 %v27, 1.0
  %v31 = vadd.f32 %v29, 1.0
  %v32 = vrcp.pop %v30
  %v33 = vrcp.pop %v31
  %v34 = vmul.f32 %v30, %v32
  %v35 = vmul.f32 %v31, %v33
  %v36 = vsub.f32 2.0, %v34
  %v37 = vsub.f32 2.0, %v35
  %v38 = vmul.f32 %v32, %v36
  %v39 = vmul.f32 %v33, %v37
  %vm40 = vcmp.ge.f32.partialorder %v18, 0.0
  %vm41 = vcmp.ge.f32.partialorder %v19, 0.0
  %v42 = vmul.f32 %v27, %v38
  %v43 = vmul.f32 %v29, %v39
  %v44 = vsel %vm40, %v38, %v42
  %v45 = vsel %vm41, %v39, %v43
  %v46 = vmax.f32 %v18, 0.0
  %v47 = vmax.f32 %v19, 0.0
  %v48 = vmul.f32 %v18, %v20
  %v49 = vmul.f32 %v19, %v21
  %v50 = vsub.f32 %v46, %v48
  %v51 = vsub.f32 %v47, %v49
  %v52 = vadd.f32 %v27, 1.0
  %v53 = vlog2.pop %v52
  %v54 = vmul.f32 %v53, 0.6931472
  %v55 = vmul.f32 -0.5, %v27
  %v56 = vadd.f32 %v55, 1.0
  %v57 = vmul.f32 %v56, %v27
  %v58 = vand.u32 2147483647, %v27
  %vm59 = vcmp.lt.f32.partialorder %v58, 0.0004427343
  %v60 = vsel %vm59, %v57, %v54
  %v61 = vadd.f32 %v29, 1.0
  %v62 = vlog2.pop %v61
  %v63 = vmul.f32 %v62, 0.6931472
  %v64 = vmul.f32 -0.5, %v29
  %v65 = vadd.f32 %v64, 1.0
  %v66 = vmul.f32 %v65, %v29
  %v67 = vand.u32 2147483647, %v29
  %vm68 = vcmp.lt.f32.partialorder %v67, 0.0004427343
  %v69 = vsel %vm68, %v66, %v63
  %v70 = vadd.f32 %v50, %v60
  %v71 = vadd.f32 %v51, %v69
  %v72 = vmul.f32 %v44, %v20
  %v73 = vmul.f32 %v45, %v21
  %v74 = vmul.f32 %v44, %v44
  %v75 = vmul.f32 %v45, %v45
  %v76 = vmul.f32 %v20, %v20
  %v77 = vmul.f32 %v21, %v21
  %v78 = vadd.f32 %v74, %v76
  %v79 = vadd.f32 %v75, %v77
  %v80 = vadd.f32 %v72, %v73
  %v81 = vadd.f32 %v78, %v79
  %v82 = vadd.f32 %v70, %v71
  %v83 = vld [vmem:[#allocation2] sm:$0xff]
  %v84 = vadd.f32 %v83, %v80
  %85 = vst [vmem:[#allocation2] sm:$0xff] %v84
  %v86 = vld [vmem:[#allocation3] sm:$0xff]
  %v87 = vadd.f32 %v86, %v81
  %88 = vst [vmem:[#allocation3] sm:$0xff] %v87
  %v89 = vld [vmem:[#allocation4] sm:$0xff]
  %v90 = vadd.f32 %v89, %v82
  %91 = vst [vmem:[#allocation4] sm:$0xff] %v90
  // Predicated region
  $region14: #{segmentation_loss.1} parent=0 // pred_check
    %p92 = pneg %p11
  $region15: #{segmentation_loss.1} parent=0 // pred_check_branch
    %94 = sbr.rel (%p92) target = $region17
  $region16: #{segmentation_loss.1} parent=0 // pred_region
    %v95 = vld [vmem:[#allocation2] sm:$0xff]
    %96 = vadd.xlane.f32.xlu0 %v95
    %v97 = vpop.xlane.xlu0 %96
    %v98 = vld [vmem:[#allocation3] sm:$0xff]
    %99 = vadd.xlane.f32.xlu0 %v98
    %v100 = vpop.xlane.xlu0 %99
    %v101 = vld [vmem:[#allocation4] sm:$0xff]
    %102 = vadd.xlane.f32.xlu0 %v101
    %v103 = vpop.xlane.xlu0 %102
    %v104 = vmul.f32 %v97, 2.0
    %v105 = vadd.f32 %v104, 1e-07
    %v106 = vadd.f32 %v100, 1e-07
    %v107 = vrcp.pop %v106
    %v108 = vmul.f32 %v105, %v107
    %v109 = vsub.f32 1.0, %v108
    %vm110 = vcmask 7168
    %111 = vst.msk [vmem:[%s2] sm:$0xff] %vm110, %v109
    %v112 = vmul.f32 %v103, 0.00390625
    %vm113 = vcmask 15368
    %114 = vst.msk [vmem:[%s2] sm:$0xff] %vm113, %v112
  $region17: #{segmentation_loss.1} parent=0 // pred_fallthru
    _
  // Predicated region
  $region18: #{segmentation_loss.1} parent=0 // pred_check
    _
  $region19: #{segmentation_loss.1} parent=0 // pred_check_branch
    %116 = sbr.rel (0) target = $region21
  $region20: #{segmentation_loss.1} parent=0 // pred_region
    _
  $region21: #{segmentation_loss.1} parent=0 // pred_fallthru
    _
  // Predicated region
  $region22: #{segmentation_loss.1} parent=0 // pred_check
    _
  $region23: #{segmentation_loss.1} parent=0 // pred_check_branch
    %118 = sbr.rel (0) target = $region25
  $region24: #{segmentation_loss.1} parent=0 // pred_region
    _
  $region25: #{segmentation_loss.1} parent=0 // pred_fallthru
    _

</llo_original>
